<compile_context>
chip_gen: v7x
topology: tpu7x:2x2x1
jax: 0.10.0
libtpu: 0.0.40
codegen_flags: <defaults>
</compile_context>

<pallas_src>
import math
import functools

import jax
import jax.numpy as jnp
from jax.experimental import pallas as pl
from jax.experimental.pallas import tpu as pltpu

_INV_SQRT2 = 0.7071067811865475


def _round_up(x, m):
    return ((x + m - 1) // m) * m


def _cdiv(a, b):
    return -(-a // b)


# ----------------------------- kernels ---------------------------------------
def _mlp_kernel_fused(x_ref, wfc_ref, bfc_ref, wpj_ref, bpj_ref, o_ref):
    """Full fused MLP for one row tile; hidden dim resident in VMEM.

    grid = (num_row_tiles,).  Weight index maps are grid-invariant, so the
    weight blocks are DMA'd from HBM exactly once for the whole kernel.
    """
    cdt = wfc_ref.dtype                                   # MXU compute dtype (bf16)
    x = x_ref[...].astype(cdt)                            # cast activations in VMEM

    hid = jnp.dot(x, wfc_ref[...], preferred_element_type=jnp.float32)
    hid = hid + bfc_ref[...]                              # (1, H) f32 bias broadcast
    # exact (erf) GELU, matching torch.nn.GELU default; multiply, no divide
    hid = 0.5 * hid * (1.0 + jax.lax.erf(hid * _INV_SQRT2))

    out = jnp.dot(hid.astype(cdt), wpj_ref[...], preferred_element_type=jnp.float32)
    o_ref[...] = (out + bpj_ref[...]).astype(o_ref.dtype)


def _mlp_kernel_tiled(x_ref, wfc_ref, bfc_ref, wpj_ref, bpj_ref, o_ref, acc_ref):
    """One (row_tile, hidden_tile) step; hidden axis is a reduction into acc_ref.

    grid = (num_row_tiles, num_hidden_tiles), hidden axis innermost ("arbitrary").
    """
    h = pl.program_id(1)

    @pl.when(h == 0)
    def _():
        acc_ref[...] = jnp.zeros_like(acc_ref)

    cdt = wfc_ref.dtype
    hid = jnp.dot(x_ref[...].astype(cdt), wfc_ref[...],
                  preferred_element_type=jnp.float32)
    hid = hid + bfc_ref[...]
    hid = 0.5 * hid * (1.0 + jax.lax.erf(hid * _INV_SQRT2))

    acc_ref[...] += jnp.dot(hid.astype(cdt), wpj_ref[...],
                            preferred_element_type=jnp.float32)

    @pl.when(h == pl.num_programs(1) - 1)
    def _():
        o_ref[...] = (acc_ref[...] + bpj_ref[...]).astype(o_ref.dtype)


# --------------------------- tile selection -----------------------------------
def _vmem_budget():
    """(tile-selection byte budget, vmem_limit_bytes) derived from the chip."""
    phys = 64 * 1024 * 1024                                # conservative default
    try:
        info = pltpu.get_tpu_info()
        phys = int(getattr(info, "vmem_capacity_bytes", phys))
    except Exception:
        pass
    vmem_limit = max(int(phys * 0.78), 32 * 1024 * 1024)   # ~100MiB on 128, ~50 on 64
    budget = max(int(vmem_limit * 0.85), 24 * 1024 * 1024)  # headroom for Mosaic scratch
    return budget, vmem_limit


def _select_tiles(m_rows, d_model, hidden, x_bytes, w_bytes, out_bytes, budget):
    """Pick (row_tile, hidden_tile, fuse_full_hidden) under a VMEM byte budget."""

    def footprint(tm, th, with_acc):
        f = 2 * tm * d_model * x_bytes            # x tile (double buffered)
        f += 2 * d_model * th * w_bytes           # c_fc weight tile
        f += 2 * th * 4                           # c_fc bias tile (f32)
        f += 2 * th * d_model * w_bytes           # c_proj weight tile
        f += 2 * d_model * 4                      # c_proj bias tile (f32)
        f += 2 * tm * d_model * out_bytes         # output tile
        f += tm * th * (4 + w_bytes)              # GELU intermediate (f32 + bf16 copy)
        if with_acc:
            f += tm * d_model * 4                 # f32 accumulator scratch
        return f

    # Balanced row-tile candidates (multiples of 8, minimal padding waste).
    tm_cands = []
    for target in (512, 256, 128, 64, 32, 16, 8):
        n = max(1, _cdiv(m_rows, target))
        tm = _round_up(max(1, _cdiv(m_rows, n)), 8)
        if tm not in tm_cands:
            tm_cands.append(tm)
    tm_cands.sort(reverse=True)

    # Path A: full hidden per step -> weights fetched from HBM exactly once.
    for tm in tm_cands:
        if footprint(tm, hidden, with_acc=False) <= budget:
            return tm, hidden, True
        if tm <= 128:
            break    # don't starve the MXU just to keep the hidden dim un-tiled

    # Path B: tile the hidden (reduction) axis; maximize tm first, since tm sets
    # total weight HBM traffic (weights are re-streamed once per row tile).
    th_cands = [t for t in (2048, 1024, 512, 256, 128)
                if t <= hidden and hidden % t == 0]
    if not th_cands:
        th_cands = [hidden]
    for tm in tm_cands:
        for th in th_cands:
            if footprint(tm, th, with_acc=True) <= budget:
                return tm, th, False
    return tm_cands[-1], th_cands[-1], False


# ------------------------------ wrappers ---------------------------------------
def prepare_mlp_weights(c_fc_w, c_fc_b, c_proj_w, c_proj_b,
                        compute_dtype=jnp.bfloat16):
    """One-time weight preparation -- cache the result; NOT on the forward path.

    Transposes torch nn.Linear layouts to (in, out), casts the matmul operands to
    the MXU compute dtype, keeps biases in f32, and zero-pads the hidden dim to a
    multiple of 128 (GELU(0)=0 and zero c_proj rows => padded columns are inert).
    """
    mlp_width, d_model = c_fc_w.shape
    hp = _round_up(mlp_width, 128)

    w_fc = jnp.transpose(c_fc_w).astype(compute_dtype)        # (d_model, mlp_width)
    w_pj = jnp.transpose(c_proj_w).astype(compute_dtype)      # (mlp_width, d_model)
    b_fc = c_fc_b.astype(jnp.float32).reshape(1, mlp_width)
    b_pj = c_proj_b.astype(jnp.float32).reshape(1, d_model)

    if hp != mlp_width:
        w_fc = jnp.pad(w_fc, ((0, 0), (0, hp - mlp_width)))
        w_pj = jnp.pad(w_pj, ((0, hp - mlp_width), (0, 0)))
        b_fc = jnp.pad(b_fc, ((0, 0), (0, hp - mlp_width)))
    return w_fc, b_fc, w_pj, b_pj


@jax.jit
def mlp_pallas(x, w_fc, b_fc, w_pj, b_pj):
    """Fused MLP forward.  Weights must come from `prepare_mlp_weights` (cached).

    x:    (..., d_model), any float dtype (cast to the MXU dtype in-kernel)
    w_fc: (d_model, hidden_padded)  compute dtype (bf16)
    b_fc: (1, hidden_padded)        f32
    w_pj: (hidden_padded, d_model)  compute dtype (bf16)
    b_pj: (1, d_model)              f32
    """
    orig_shape = x.shape
    d_model = orig_shape[-1]
    hidden = w_fc.shape[1]
    m_rows = math.prod(orig_shape[:-1])

    x_bytes = jnp.dtype(x.dtype).itemsize
    w_bytes = jnp.dtype(w_fc.dtype).itemsize
    out_bytes = jnp.dtype(x.dtype).itemsize

    budget, vmem_limit = _vmem_budget()
    tm, th, fused = _select_tiles(m_rows, d_model, hidden,
                                  x_bytes, w_bytes, out_bytes, budget)

    # On the fused path splitting the row axis is free (weights read once) and
    # lets v7x's two TensorCores share the "parallel" axis.
    if fused and m_rows >= 256 and _cdiv(m_rows, tm) == 1:
        tm = _round_up(_cdiv(m_rows, 2), 8)

    m_pad = _round_up(max(m_rows, 1), tm)
    x2 = x.reshape(m_rows, d_model)
    if m_pad != m_rows:
        x2 = jnp.pad(x2, ((0, m_pad - m_rows), (0, 0)))

    if fused:
        grid = (m_pad // tm,)
        out = pl.pallas_call(
            _mlp_kernel_fused,
            out_shape=jax.ShapeDtypeStruct((m_pad, d_model), x.dtype),
            grid_spec=pltpu.PrefetchScalarGridSpec(
                num_scalar_prefetch=0,
                grid=grid,
                in_specs=[
                    pl.BlockSpec((tm, d_model), lambda i: (i, 0)),
                    # grid-invariant weight/bias blocks: DMA'd once per kernel call
                    pl.BlockSpec((d_model, hidden), lambda i: (0, 0)),
                    pl.BlockSpec((1, hidden), lambda i: (0, 0)),
                    pl.BlockSpec((hidden, d_model), lambda i: (0, 0)),
                    pl.BlockSpec((1, d_model), lambda i: (0, 0)),
                ],
                out_specs=pl.BlockSpec((tm, d_model), lambda i: (i, 0)),
            ),
            compiler_params=pltpu.CompilerParams(
                dimension_semantics=("parallel",),
                vmem_limit_bytes=vmem_limit,
            ),
        )(x2, w_fc, b_fc, w_pj, b_pj)
    else:
        grid = (m_pad // tm, hidden // th)
        out = pl.pallas_call(
            _mlp_kernel_tiled,
            out_shape=jax.ShapeDtypeStruct((m_pad, d_model), x.dtype),
            grid_spec=pltpu.PrefetchScalarGridSpec(
                num_scalar_prefetch=0,
                grid=grid,
                in_specs=[
                    pl.BlockSpec((tm, d_model), lambda i, h: (i, 0)),
                    pl.BlockSpec((d_model, th), lambda i, h: (0, h)),
                    pl.BlockSpec((1, th), lambda i, h: (0, h)),
                    pl.BlockSpec((th, d_model), lambda i, h: (h, 0)),
                    pl.BlockSpec((1, d_model), lambda i, h: (0, 0)),
                ],
                out_specs=pl.BlockSpec((tm, d_model), lambda i, h: (i, 0)),
                scratch_shapes=[pltpu.VMEM((tm, d_model), jnp.float32)],
            ),
            compiler_params=pltpu.CompilerParams(
                dimension_semantics=("parallel", "arbitrary"),
                vmem_limit_bytes=vmem_limit,
            ),
        )(x2, w_fc, b_fc, w_pj, b_pj)

    if m_pad != m_rows:
        out = out[:m_rows]
    return out.reshape(orig_shape)


# -------------------- pure-JAX references (for validation) --------------------
def _ref_mlp_f32(x, c_fc_w, c_fc_b, c_proj_w, c_proj_b):
    """Exact torch semantics in f32."""
    h = x @ c_fc_w.T + c_fc_b
    h = jax.nn.gelu(h, approximate=False)
    return h @ c_proj_w.T + c_proj_b


def _ref_mlp_bf16(x, c_fc_w, c_fc_b, c_proj_w, c_proj_b):
    """Same mixed precision as the kernel (bf16 operands, f32 accumulation)."""
    w_fc = jnp.transpose(c_fc_w).astype(jnp.bfloat16)
    w_pj = jnp.transpose(c_proj_w).astype(jnp.bfloat16)
    h = jnp.dot(x.astype(jnp.bfloat16), w_fc,
                preferred_element_type=jnp.float32) + c_fc_b.astype(jnp.float32)
    h = 0.5 * h * (1.0 + jax.lax.erf(h * _INV_SQRT2))
    out = jnp.dot(h.astype(jnp.bfloat16), w_pj,
                  preferred_element_type=jnp.float32) + c_proj_b.astype(jnp.float32)
    return out.astype(x.dtype)


if __name__ == "__main__":
    B, N, D_MODEL = 2, 8, 32          # small shapes consistent with the module
    MLP_WIDTH = 4 * D_MODEL           # 128

    key = jax.random.PRNGKey(0)
    kx, k1, k2, k3, k4 = jax.random.split(key, 5)
    x = jax.random.normal(kx, (B, N, D_MODEL), dtype=jnp.float32)
    c_fc_w = 0.02 * jax.random.normal(k1, (MLP_WIDTH, D_MODEL), dtype=jnp.float32)
    c_fc_b = 0.01 * jax.random.normal(k2, (MLP_WIDTH,), dtype=jnp.float32)
    c_proj_w = 0.02 * jax.random.normal(k3, (D_MODEL, MLP_WIDTH), dtype=jnp.float32)
    c_proj_b = 0.01 * jax.random.normal(k4, (D_MODEL,), dtype=jnp.float32)

    # One-time weight preparation (cache this in real use; not on the hot path).
    w_fc, b_fc, w_pj, b_pj = prepare_mlp_weights(c_fc_w, c_fc_b, c_proj_w, c_proj_b)

    out = jax.block_until_ready(mlp_pallas(x, w_fc, b_fc, w_pj, b_pj))
    assert out.shape == (B, N, D_MODEL)

    # Match against a reference using the identical mixed precision (tight).
    ref_mixed = jax.block_until_ready(
        _ref_mlp_bf16(x, c_fc_w, c_fc_b, c_proj_w, c_proj_b))
    err_mixed = float(jnp.max(jnp.abs(out - ref_mixed)))
    assert jnp.allclose(out, ref_mixed, rtol=1e-3, atol=1e-4), \
        f"mixed-precision ref mismatch, max abs diff {err_mixed}"

    # Match against the exact f32 torch-semantics reference (looser, bf16 rounding).
    ref_f32 = jax.block_until_ready(
        _ref_mlp_f32(x, c_fc_w, c_fc_b, c_proj_w, c_proj_b))
    err_f32 = float(jnp.max(jnp.abs(out - ref_f32)))
    assert jnp.allclose(out, ref_f32, rtol=2e-2, atol=2e-3), \
        f"f32 ref mismatch, max abs diff {err_f32}"

    # Exercise the row-padding path (row count not a multiple of 8).
    x_odd = x[:, :7, :]
    out_odd = jax.block_until_ready(mlp_pallas(x_odd, w_fc, b_fc, w_pj, b_pj))
    ref_odd = jax.block_until_ready(
        _ref_mlp_bf16(x_odd, c_fc_w, c_fc_b, c_proj_w, c_proj_b))
    assert out_odd.shape == x_odd.shape
    assert jnp.allclose(out_odd, ref_odd, rtol=1e-3, atol=1e-4), "padded-row mismatch"

    print("KERNEL_OK")
</pallas_src>

<mosaic_0001>
module attributes {stable_mosaic.version = 11 : i64} {
  func.func @_mlp_kernel_fused(%arg0: i32, %arg1: memref<16x32xf32, #tpu.memory_space<vmem>>, %arg2: memref<32x128xbf16, #tpu.memory_space<vmem>>, %arg3: memref<1x128xf32, #tpu.memory_space<vmem>>, %arg4: memref<128x32xbf16, #tpu.memory_space<vmem>>, %arg5: memref<1x32xf32, #tpu.memory_space<vmem>>, %arg6: memref<16x32xf32, #tpu.memory_space<vmem>>) attributes {dimension_semantics = [#tpu.dimension_semantics<parallel>], iteration_bounds = array<i64: 1>, scalar_prefetch = 0 : i64, scratch_operands = 0 : i64, tpu.core_type = #tpu.core_type<tc>, window_params = [{transform_indices = @transform_0, window_bounds = array<i64: 16, 32>}, {pipeline_mode = #tpu.pipeline_mode<synchronous>, transform_indices = @transform_1, window_bounds = array<i64: 32, 128>}, {pipeline_mode = #tpu.pipeline_mode<synchronous>, transform_indices = @transform_2, window_bounds = array<i64: 1, 128>}, {pipeline_mode = #tpu.pipeline_mode<synchronous>, transform_indices = @transform_3, window_bounds = array<i64: 128, 32>}, {pipeline_mode = #tpu.pipeline_mode<synchronous>, transform_indices = @transform_4, window_bounds = array<i64: 1, 32>}, {transform_indices = @transform_5, window_bounds = array<i64: 16, 32>}]} {
    %c0 = arith.constant 0 : index
    %c0_0 = arith.constant 0 : index
    %0 = vector.load %arg1[%c0, %c0_0] : memref<16x32xf32, #tpu.memory_space<vmem>>, vector<16x32xf32>
    %1 = arith.truncf %0 : vector<16x32xf32> to vector<16x32xbf16>
    %c0_1 = arith.constant 0 : index
    %c0_2 = arith.constant 0 : index
    %2 = vector.load %arg2[%c0_1, %c0_2] : memref<32x128xbf16, #tpu.memory_space<vmem>>, vector<32x128xbf16>
    %cst = arith.constant dense<0.000000e+00> : vector<16x128xf32>
    %3 = tpu.matmul %1, %2, %cst {dimension_numbers = #tpu.dot_dimension_numbers<[1], [0], [0], [1], [0, 0, 1, 1], [], []>} : vector<16x32xbf16>, vector<32x128xbf16>, vector<16x128xf32> -> vector<16x128xf32>
    %c0_3 = arith.constant 0 : index
    %c0_4 = arith.constant 0 : index
    %4 = vector.load %arg3[%c0_3, %c0_4] : memref<1x128xf32, #tpu.memory_space<vmem>>, vector<1x128xf32>
    %5 = vector.broadcast %4 : vector<1x128xf32> to vector<16x128xf32>
    %6 = arith.addf %3, %5 : vector<16x128xf32>
    %cst_5 = arith.constant 5.000000e-01 : f32
    %7 = vector.broadcast %cst_5 : f32 to vector<16x128xf32>
    %8 = arith.mulf %7, %6 : vector<16x128xf32>
    %cst_6 = arith.constant 0.707106769 : f32
    %9 = vector.broadcast %cst_6 : f32 to vector<16x128xf32>
    %10 = arith.mulf %6, %9 : vector<16x128xf32>
    %11 = math.erf %10 : vector<16x128xf32>
    %cst_7 = arith.constant 1.000000e+00 : f32
    %12 = vector.broadcast %cst_7 : f32 to vector<16x128xf32>
    %13 = arith.addf %12, %11 : vector<16x128xf32>
    %14 = arith.mulf %8, %13 : vector<16x128xf32>
    %15 = arith.truncf %14 : vector<16x128xf32> to vector<16x128xbf16>
    %c0_8 = arith.constant 0 : index
    %c0_9 = arith.constant 0 : index
    %16 = vector.load %arg4[%c0_8, %c0_9] : memref<128x32xbf16, #tpu.memory_space<vmem>>, vector<128x32xbf16>
    %cst_10 = arith.constant dense<0.000000e+00> : vector<16x32xf32>
    %17 = tpu.matmul %15, %16, %cst_10 {dimension_numbers = #tpu.dot_dimension_numbers<[1], [0], [0], [1], [0, 0, 1, 1], [], []>} : vector<16x128xbf16>, vector<128x32xbf16>, vector<16x32xf32> -> vector<16x32xf32>
    %c0_11 = arith.constant 0 : index
    %c0_12 = arith.constant 0 : index
    %18 = vector.load %arg5[%c0_11, %c0_12] : memref<1x32xf32, #tpu.memory_space<vmem>>, vector<1x32xf32>
    %19 = vector.broadcast %18 : vector<1x32xf32> to vector<16x32xf32>
    %20 = arith.addf %17, %19 : vector<16x32xf32>
    %c0_13 = arith.constant 0 : index
    %c0_14 = arith.constant 0 : index
    %21 = vector.load %arg6[%c0_13, %c0_14] : memref<16x32xf32, #tpu.memory_space<vmem>>, vector<16x32xf32>
    tpu.vector_store %arg6[%c0_13, %c0_14], %20 {strides = array<i32>} : memref<16x32xf32, #tpu.memory_space<vmem>>, vector<16x32xf32>,
    return
  }
  func.func @transform_0(%arg0: i32) -> (i32, i32) {
    %c0_i32 = arith.constant 0 : i32
    %c0_i32_0 = arith.constant 0 : i32
    return %arg0, %c0_i32 : i32, i32
  }
  func.func @transform_1(%arg0: i32) -> (i32, i32) {
    %c0_i32 = arith.constant 0 : i32
    %c0_i32_0 = arith.constant 0 : i32
    %c0_i32_1 = arith.constant 0 : i32
    return %c0_i32, %c0_i32_0 : i32, i32
  }
  func.func @transform_2(%arg0: i32) -> (i32, i32) {
    %c0_i32 = arith.constant 0 : i32
    %c0_i32_0 = arith.constant 0 : i32
    %c0_i32_1 = arith.constant 0 : i32
    return %c0_i32, %c0_i32_0 : i32, i32
  }
  func.func @transform_3(%arg0: i32) -> (i32, i32) {
    %c0_i32 = arith.constant 0 : i32
    %c0_i32_0 = arith.constant 0 : i32
    %c0_i32_1 = arith.constant 0 : i32
    return %c0_i32, %c0_i32_0 : i32, i32
  }
  func.func @transform_4(%arg0: i32) -> (i32, i32) {
    %c0_i32 = arith.constant 0 : i32
    %c0_i32_0 = arith.constant 0 : i32
    %c0_i32_1 = arith.constant 0 : i32
    return %c0_i32, %c0_i32_0 : i32, i32
  }
  func.func @transform_5(%arg0: i32) -> (i32, i32) {
    %c0_i32 = arith.constant 0 : i32
    %c0_i32_0 = arith.constant 0 : i32
    return %arg0, %c0_i32 : i32, i32
  }
}

</mosaic_0001>

<llo_original>
// kernel: mlp_pallas.1
$region0: #{mlp_pallas.1}
  #allocation0 [shape = 'u32[]', space=smem, size = 0x4, offset = 0x4, fixed_abs, tag = 'smem constant byte address 0x4 - core index']
  #allocation1 [shape = 'u32[144,128]{1,0:T(1,128)}', space=vmem, size = 0x12000, scoped, tag = 'internal scratch']
  %s0 = inlined_call_operand.vmem [shape: f32[16,32], index: 0, kind: input, shape index: {}]
  %s1 = inlined_call_operand.vmem [shape: bf16[32,128], index: 1, kind: input, shape index: {}]
  %s2 = inlined_call_operand.vmem [shape: f32[1,128], index: 2, kind: input, shape index: {}]
  %s3 = inlined_call_operand.vmem [shape: bf16[128,32], index: 3, kind: input, shape index: {}]
  %s4 = inlined_call_operand.vmem [shape: f32[1,32], index: 4, kind: input, shape index: {}]
  %s5 = inlined_call_operand.hbm [shape: f32[16,32], index: 5, kind: output, shape index: {}]
  %s6 = sld [smem:[#allocation0]]
  $region30: #{mlp_pallas.1} parent=0
    _
  %s8 = ssub.s32 1, %s6
  %s9 = scalar_select 0, %s8, %s6
  $region1: #{mlp_pallas.1} parent=0
    #allocation2 [shape = 'u8[8192]{0}', space=vmem, size = 0x2000, scoped, tag = 'output window, operand 0, single buffered']
    #allocation3 [shape = 's32[1]{0}', space=sflag, size = 0x4, scoped, tag = 'scoped memory for mlp_pallas.1']
    %10 = vsyncpa [#allocation3], 0
    // Predicated region
    $region2: #{mlp_pallas.1} parent=1 // pred_check
      _
    $region3: #{mlp_pallas.1} parent=1 // pred_check_branch
      %12 = sbr.rel (0) target = $region5
    $region4: #{mlp_pallas.1} parent=1 // pred_region
      _
    $region5: #{mlp_pallas.1} parent=1 // pred_fallthru
      _
    // Predicated region
    $region6: #{mlp_pallas.1} parent=1 // pred_check
      _
    $region7: #{mlp_pallas.1} parent=1 // pred_check_branch
      %14 = sbr.rel (0) target = $region9
    $region8: #{mlp_pallas.1} parent=1 // pred_region
      _
    $region9: #{mlp_pallas.1} parent=1 // pred_fallthru
      _
    // Predicated region
    $region10: #{mlp_pallas.1} parent=1 // pred_check
      _
    $region11: #{mlp_pallas.1} parent=1 // pred_check_branch
      %16 = sbr.rel (0) target = $region13
    $region12: #{mlp_pallas.1} parent=1 // pred_region
      _
    $region13: #{mlp_pallas.1} parent=1 // pred_fallthru
      _
    // Predicated region
    $region14: #{mlp_pallas.1} parent=1 // pred_check
      _
    $region15: #{mlp_pallas.1} parent=1 // pred_check_branch
      %18 = sbr.rel (0) target = $region17
    $region16: #{mlp_pallas.1} parent=1 // pred_region
      _
    $region17: #{mlp_pallas.1} parent=1 // pred_fallthru
      _
    // Predicated region
    $region18: #{mlp_pallas.1} parent=1 // pred_check
      _
    $region19: #{mlp_pallas.1} parent=1 // pred_check_branch
      %20 = sbr.rel (0) target = $region21
    $region20: #{mlp_pallas.1} parent=1 // pred_region
      _
    $region21: #{mlp_pallas.1} parent=1 // pred_fallthru
      _
    %v22 = vld [vmem:[%s0] sm:$0xff]
    %v23 = vld [vmem:[%s0 + $0x8] sm:$0xff]
    %v24 = vpack.c.bf16 %v23, %v22
    %v25 = vld [vmem:[%s1] sm:$0xf]
    %v26 = vld [vmem:[%s1 + $0x4] sm:$0xf]
    %v27 = vld [vmem:[%s1 + $0x8] sm:$0xf]
    %v28 = vld [vmem:[%s1 + $0xc] sm:$0xf]
    %v29 = vld [vmem:[%s2] sm:$0x1]
    %v31 = vlaneseq
    %v32 = vshrl.u32 %v31, 7
    %v33 = vsub.s32 0, %v32
    %v34 = vrot.slane %v29, %v33
    %v40 = vunpack.c.l.b16 %v25
    %v41 = vunpack.c.l.b16 %v26
    %v42 = vunpack.c.l.b16 %v27
    %v43 = vunpack.c.l.b16 %v28
    %v44 = vpack.c.b16 %v41, %v40
    %v45 = vpack.c.b16 %v43, %v42
    %vm48 = vcmask 261120
    %v50 = vsel %vm48, %v24, 0
    %52 = vmatprep.subr.bf16.mxu0 0
    %53 = vmatpush1.bf16.msra.mxu0 %v44
    %54 = vmatprep.subr.bf16.mxu0 0
    %55 = vmatpush1.bf16.msra.mxu0 %v45
    %56 = vmatprep.subr.bf16.mxu0 0
    %57 = vmatpush1.bf16.msra.mxu0 0
    %58 = vmatprep.subr.bf16.mxu0 0
    %59 = vmatpush1.bf16.msra.mxu0 0
    %60 = vmatprep.subr.bf16.mxu0 0
    %61 = vmatpush1.bf16.msra.mxu0 0
    %62 = vmatprep.subr.bf16.mxu0 0
    %63 = vmatpush1.bf16.msra.mxu0 0
    %64 = vmatprep.subr.bf16.mxu0 0
    %65 = vmatpush1.bf16.msra.mxu0 0
    %66 = vmatprep.subr.bf16.mxu0 0
    %67 = vmatpush1.bf16.msra.mxu0 0
    %68 = vmatprep.subr.bf16.mxu0 0
    %69 = vmatpush1.bf16.msra.mxu0 0
    %70 = vmatprep.subr.bf16.mxu0 0
    %71 = vmatpush1.bf16.msra.mxu0 0
    %72 = vmatprep.subr.bf16.mxu0 0
    %73 = vmatpush1.bf16.msra.mxu0 0
    %74 = vmatprep.subr.bf16.mxu0 0
    %75 = vmatpush1.bf16.msra.mxu0 0
    %76 = vmatprep.subr.bf16.mxu0 0
    %77 = vmatpush1.bf16.msra.mxu0 0
    %78 = vmatprep.subr.bf16.mxu0 0
    %79 = vmatpush1.bf16.msra.mxu0 0
    %80 = vmatprep.subr.bf16.mxu0 0
    %81 = vmatpush1.bf16.msra.mxu0 0
    %82 = vmatprep.subr.bf16.mxu0 0
    %83 = vmatpush1.bf16.msra.mxu0 0
    %84 = vmatprep.mubr.bf16.mxu0 0
    %85 = vmatmul.mubr.bf16.gmra.mrb[0].mxu0 %v50
    %v86 = vpop.f32.mrb[0].mxu0
    %v87 = vadd.f32 %v34, %v86
    %v88 = vpop.f32.mrb[0].mxu0
    %v89 = vpop.f32.mrb[0].mxu0
    %v90 = vadd.f32 %v34, %v89
    %v91 = vpop.f32.mrb[0].mxu0
    %92 = vdwg.mxu0
    %v93 = vmul.f32 %v87, 0.5
    %v94 = vmul.f32 %v90, 0.5
    %v95 = vmul.f32 %v87, 0.70710677
    %v96 = vmul.f32 %v90, 0.70710677
    %v97 = verf.f32.pop %v95
    %v98 = verf.f32.pop %v96
    %v99 = vadd.f32 %v97, 1.0
    %v100 = vadd.f32 %v98, 1.0
    %v101 = vmul.f32 %v93, %v99
    %v102 = vmul.f32 %v94, %v100
    %v103 = vpack.c.bf16 %v102, %v101
    %v104 = vld [vmem:[%s3] sm:$0xf]
    %v105 = vld [vmem:[%s3 + $0x4] sm:$0xf]
    %v106 = vld [vmem:[%s3 + $0x8] sm:$0xf]
    %v107 = vld [vmem:[%s3 + $0xc] sm:$0xf]
    %v108 = vld [vmem:[%s3 + $0x10] sm:$0xf]
    %v109 = vld [vmem:[%s3 + $0x14] sm:$0xf]
    %v110 = vld [vmem:[%s3 + $0x18] sm:$0xf]
    %v111 = vld [vmem:[%s3 + $0x1c] sm:$0xf]
    %v112 = vld [vmem:[%s3 + $0x20] sm:$0xf]
    %v113 = vld [vmem:[%s3 + $0x24] sm:$0xf]
    %v114 = vld [vmem:[%s3 + $0x28] sm:$0xf]
    %v115 = vld [vmem:[%s3 + $0x2c] sm:$0xf]
    %v116 = vld [vmem:[%s3 + $0x30] sm:$0xf]
    %v117 = vld [vmem:[%s3 + $0x34] sm:$0xf]
    %v118 = vld [vmem:[%s3 + $0x38] sm:$0xf]
    %v119 = vld [vmem:[%s3 + $0x3c] sm:$0xf]
    %v120 = vld [vmem:[%s4] sm:$0x1]
    %v122 = vlaneseq
    %v123 = vshrl.u32 %v122, 7
    %v124 = vsub.s32 0, %v123
    %v125 = vrot.slane %v120, %v124
    %v143 = vunpack.c.l.b16 %v104
    %v144 = vunpack.c.l.b16 %v105
    %v145 = vunpack.c.l.b16 %v106
    %v146 = vunpack.c.l.b16 %v107
    %v147 = vunpack.c.l.b16 %v108
    %v148 = vunpack.c.l.b16 %v109
    %v149 = vunpack.c.l.b16 %v110
    %v150 = vunpack.c.l.b16 %v111
    %v151 = vunpack.c.l.b16 %v112
    %v152 = vunpack.c.l.b16 %v113
    %v153 = vunpack.c.l.b16 %v114
    %v154 = vunpack.c.l.b16 %v115
    %v155 = vunpack.c.l.b16 %v116
    %v156 = vunpack.c.l.b16 %v117
    %v157 = vunpack.c.l.b16 %v118
    %v158 = vunpack.c.l.b16 %v119
    %v159 = vpack.c.b16 %v144, %v143
    %v160 = vpack.c.b16 %v146, %v145
    %v161 = vpack.c.b16 %v148, %v147
    %v162 = vpack.c.b16 %v150, %v149
    %v163 = vpack.c.b16 %v152, %v151
    %v164 = vpack.c.b16 %v154, %v153
    %v165 = vpack.c.b16 %v156, %v155
    %v166 = vpack.c.b16 %v158, %v157
    %175 = vmatprep.subr.bf16.mxu0 0
    %176 = vmatpush1.bf16.msra.mxu0 %v159
    %177 = vmatprep.subr.bf16.mxu0 0
    %178 = vmatpush1.bf16.msra.mxu0 %v160
    %179 = vmatprep.subr.bf16.mxu0 0
    %180 = vmatpush1.bf16.msra.mxu0 %v161
    %181 = vmatprep.subr.bf16.mxu0 0
    %182 = vmatpush1.bf16.msra.mxu0 %v162
    %183 = vmatprep.subr.bf16.mxu0 0
    %184 = vmatpush1.bf16.msra.mxu0 %v163
    %185 = vmatprep.subr.bf16.mxu0 0
    %186 = vmatpush1.bf16.msra.mxu0 %v164
    %187 = vmatprep.subr.bf16.mxu0 0
    %188 = vmatpush1.bf16.msra.mxu0 %v165
    %189 = vmatprep.subr.bf16.mxu0 0
    %190 = vmatpush1.bf16.msra.mxu0 %v166
    %191 = vmatprep.subr.bf16.mxu0 0
    %192 = vmatpush1.bf16.msra.mxu0 0
    %193 = vmatprep.subr.bf16.mxu0 0
    %194 = vmatpush1.bf16.msra.mxu0 0
    %195 = vmatprep.subr.bf16.mxu0 0
    %196 = vmatpush1.bf16.msra.mxu0 0
    %197 = vmatprep.subr.bf16.mxu0 0
    %198 = vmatpush1.bf16.msra.mxu0 0
    %199 = vmatprep.subr.bf16.mxu0 0
    %200 = vmatpush1.bf16.msra.mxu0 0
    %201 = vmatprep.subr.bf16.mxu0 0
    %202 = vmatpush1.bf16.msra.mxu0 0
    %203 = vmatprep.subr.bf16.mxu0 0
    %204 = vmatpush1.bf16.msra.mxu0 0
    %205 = vmatprep.subr.bf16.mxu0 0
    %206 = vmatpush1.bf16.msra.mxu0 0
    %207 = vmatprep.mubr.bf16.mxu0 0
    %208 = vmatmul.mubr.bf16.gmra.mrb[0].mxu0 %v103
    %v209 = vpop.f32.mrb[0].mxu0
    %v210 = vadd.f32 %v125, %v209
    %v211 = vpop.f32.mrb[0].mxu0
    %v212 = vpop.f32.mrb[0].mxu0
    %v213 = vadd.f32 %v125, %v212
    %v214 = vpop.f32.mrb[0].mxu0
    %215 = vdwg.mxu0
    %216 = vst.msk [vmem:[#allocation2] sm:$0xff] %vm48, %v210
    %217 = vst.msk [vmem:[#allocation2 + $0x8] sm:$0xff] %vm48, %v213
    // Predicated region
    $region22: #{mlp_pallas.1} parent=1 // pred_check
      _
    $region23: #{mlp_pallas.1} parent=1 // pred_check_branch
      %219 = sbr.rel (0) target = $region25
    $region24: #{mlp_pallas.1} parent=1 // pred_region
      %s221 = ssub.s32 256, 256
      %222 = vsyncadd [#allocation3], %s221
      %s223 = sshll.u32 [#allocation2], 4
      %s224 = int_to_ptr.vmem [resolvable:$true] %s223
      %229 = dma.vmem_to_hbm [thread:$0]  %s224, 256, %s5, [#allocation3], 128, 128, 8
    $region25: #{mlp_pallas.1} parent=1 // pred_fallthru
      _
    // Predicated region
    $region26: #{mlp_pallas.1} parent=1 // pred_check
      _
    $region27: #{mlp_pallas.1} parent=1 // pred_check_branch
      %231 = sbr.rel (0) target = $region29
    $region28: #{mlp_pallas.1} parent=1 // pred_region
      %232 = dma.done [#allocation3], 256
    $region29: #{mlp_pallas.1} parent=1 // pred_fallthru
      _
    %233 = vsyncpa [#allocation3], 1

</llo_original>
